<compile_context>
chip_gen: v6e
topology: v6e:2x2x1
jax: 0.10.0
libtpu: 0.0.40
codegen_flags: <defaults>
</compile_context>

<pallas_src>
import math

import jax
import jax.numpy as jnp
from jax.experimental import pallas as pl
from jax.experimental.pallas import tpu as pltpu


_LANE = 128
_MAX_LANE_WIDTH = 4096                  # max elements per row of the flat copy layout
_SUBLANE_MIN = {1: 32, 2: 16, 4: 8}     # sublane multiple per dtype byte width
_DEFAULT_CHUNK_BYTES = 8 * 1024 * 1024  # ~8 MiB per DMA (no VMEM footprint)
_MAX_INFLIGHT = 4                       # max DMAs in flight (semaphore slots)


def _choose_flat_layout(total: int):
    """Largest lane-dense (R, W) factorization of `total` with W % 128 == 0."""
    if total % _LANE != 0:
        return None
    w = min(_MAX_LANE_WIDTH, total)
    w -= w % _LANE
    while w >= _LANE and total % w != 0:
        w -= _LANE
    if w < _LANE:
        return None
    return total // w, w


def _make_hbm_copy_kernel(chunk_rows: int, n_full: int, tail_rows: int, n_slots: int):
    """Identity copy of an (R, W) array done entirely with HBM->HBM DMAs.

    Rows [0, n_full*chunk_rows) are copied in `chunk_rows`-row chunks with up
    to `n_slots` DMAs in flight (round-robin semaphore slots); the ragged tail
    (if any) is one extra DMA.  Nothing is staged through VMEM.
    """

    def kernel(x_hbm, o_hbm, sems):
        def desc(start, rows, slot):
            return pltpu.make_async_copy(
                x_hbm.at[pl.ds(start, rows)],
                o_hbm.at[pl.ds(start, rows)],
                sems.at[slot],
            )

        if n_full > 0:
            @pl.loop(0, n_full)
            def _(i):
                slot = i % n_slots
                # Before reusing a slot, retire the DMA previously issued on it.
                @pl.when(i >= n_slots)
                def _():
                    desc((i - n_slots) * chunk_rows, chunk_rows, slot).wait()
                start = pl.multiple_of(i * chunk_rows, chunk_rows)
                desc(start, chunk_rows, slot).start()

            # Drain the (up to n_slots) still-outstanding chunk DMAs, oldest first.
            n_drain = min(n_slots, n_full)
            for j in range(n_drain):
                i = n_full - n_drain + j
                desc(i * chunk_rows, chunk_rows, i % n_slots).wait()

        if tail_rows > 0:
            t = desc(n_full * chunk_rows, tail_rows, 0)
            t.start()
            t.wait()

    return kernel


def view_pallas(x, o: int, *, materialize: bool = True, alias_input: bool = False,
                chunk_bytes: int = _DEFAULT_CHUNK_BYTES):
    """Equivalent of PyTorch `x.view(-1, o)`.

    materialize=False returns the metadata-only reshape (no kernel, no HBM
    traffic).  alias_input=True adds input/output aliasing; only enable it
    when the caller donates `x`, otherwise XLA inserts a protective copy that
    doubles HBM traffic.
    """
    total = math.prod(x.shape)
    assert total % o == 0, f"cannot view {x.shape} as (-1, {o})"
    rows = total // o

    if not materialize:
        # A view is metadata-only in JAX; skip the copy entirely.
        return x.reshape(rows, o)

    itemsize = jnp.dtype(x.dtype).itemsize

    # Copy layout: prefer a shape whose last dim is a multiple of 128 so the
    # HBM tiled layout is lane-dense and the DMAs stream without padding.
    if o % _LANE == 0:
        R, W = rows, o
    else:
        flat = _choose_flat_layout(total)
        R, W = flat if flat is not None else (rows, o)

    min_sub = _SUBLANE_MIN.get(itemsize, 8)
    row_bytes = W * itemsize
    chunk_rows = max(min_sub, chunk_bytes // row_bytes)
    chunk_rows -= chunk_rows % min_sub          # keep chunk starts sublane-aligned
    chunk_rows = max(1, min(chunk_rows, R))
    n_full = R // chunk_rows
    tail_rows = R - n_full * chunk_rows
    n_slots = max(1, min(_MAX_INFLIGHT, n_full))

    kernel = _make_hbm_copy_kernel(chunk_rows, n_full, tail_rows, n_slots)

    x2d = x.reshape(R, W)  # metadata-only (row-major == torch.view ordering)
    out = pl.pallas_call(
        kernel,
        out_shape=jax.ShapeDtypeStruct((R, W), x.dtype),
        in_specs=[pl.BlockSpec(memory_space=pl.ANY)],
        out_specs=pl.BlockSpec(memory_space=pl.ANY),
        scratch_shapes=[pltpu.SemaphoreType.DMA((n_slots,))],
        cost_estimate=pl.CostEstimate(
            flops=0, transcendentals=0, bytes_accessed=2 * total * itemsize),
        input_output_aliases=({0: 0} if alias_input else {}),
    )(x2d)

    return out if (R, W) == (rows, o) else out.reshape(rows, o)


if __name__ == "__main__":
    key = jax.random.PRNGKey(0)
    k1, k2, k3 = jax.random.split(key, 3)

    # 1) Module's own case: NCHW (2, 4, 16, 16) -> view(-1, 256) = (8, 256).
    x = jax.random.normal(k1, (2, 4, 16, 16), dtype=jnp.float32)
    o = 256
    ref = jax.block_until_ready(x.reshape(-1, o))
    y = view_pallas(x, o)
    jax.block_until_ready(y)
    assert y.shape == (8, 256), y.shape
    assert y.dtype == x.dtype
    assert jnp.array_equal(y, ref), "mismatch vs reshape reference (case 1)"

    # 2) Non-lane-aligned fallback (o % 128 != 0, total % 128 != 0).
    x2 = jax.random.normal(k2, (2, 4, 6, 6), dtype=jnp.float32)
    y2 = view_pallas(x2, 36)
    jax.block_until_ready(y2)
    assert y2.shape == (8, 36), y2.shape
    assert jnp.array_equal(y2, x2.reshape(-1, 36)), "mismatch (case 2)"

    # 3) Multi-chunk path: tiny chunk size forces several DMAs in flight.
    x3 = jax.random.normal(k3, (8, 4, 16, 128), dtype=jnp.float32)
    y3 = view_pallas(x3, 128, chunk_bytes=16 * 1024)
    jax.block_until_ready(y3)
    assert y3.shape == (512, 128), y3.shape
    assert jnp.array_equal(y3, x3.reshape(-1, 128)), "mismatch (case 3)"

    print("KERNEL_OK")
</pallas_src>

<mosaic_0001>
module attributes {stable_mosaic.version = 11 : i64} {
  func.func @kernel(%arg0: memref<8x256xf32, #tpu.memory_space<any>>, %arg1: memref<8x256xf32, #tpu.memory_space<any>>, %arg2: memref<1x!tpu.dma_semaphore, #tpu.memory_space<semaphore_mem>>) attributes {dimension_semantics = [], scalar_prefetch = 0 : i64, scratch_operands = 1 : i64, tpu.core_type = #tpu.core_type<tc>} {
    %c0_i32 = arith.constant 0 : i32
    %c1_i32 = arith.constant 1 : i32
    %0 = arith.muli %c0_i32, %c1_i32 : i32
    %c0_i32_0 = arith.constant 0 : i32
    %1 = arith.addi %c0_i32_0, %0 : i32
    %c1_i32_1 = arith.constant 1 : i32
    %c0_i32_2 = arith.constant 0 : i32
    %2 = arith.cmpi eq, %c1_i32_1, %c0_i32_2 : i32
    %c1_i32_3 = arith.constant 1 : i32
    %3 = arith.select %2, %c1_i32_3, %c1_i32_1 : i32
    %4 = arith.remsi %1, %3 : i32
    %c0_i32_4 = arith.constant 0 : i32
    %5 = arith.cmpi ne, %4, %c0_i32_4 : i32
    %c0_i32_5 = arith.constant 0 : i32
    %6 = arith.cmpi slt, %4, %c0_i32_5 : i32
    %c0_i32_6 = arith.constant 0 : i32
    %7 = arith.cmpi slt, %3, %c0_i32_6 : i32
    %8 = arith.xori %6, %7 : i1
    %9 = arith.andi %8, %5 : i1
    %10 = arith.addi %4, %3 : i32
    %11 = arith.select %9, %10, %4 : i32
    %c1_i32_7 = arith.constant 1 : i32
    %12 = arith.cmpi sge, %1, %c1_i32_7 : i32
    %13 = arith.extui %12 : i1 to i32
    %c0_i32_8 = arith.constant 0 : i32
    %14 = arith.cmpi ne, %13, %c0_i32_8 : i32
    scf.if %14 {
      %c1_i32_17 = arith.constant 1 : i32
      %25 = arith.subi %1, %c1_i32_17 : i32
      %c8_i32_18 = arith.constant 8 : i32
      %26 = arith.muli %25, %c8_i32_18 : i32
      %c0_i32_19 = arith.constant 0 : i32
      %27 = tpu.memref_slice %arg0[%26, %c0_i32_19] : memref<8x256xf32, #tpu.memory_space<any>> -> memref<8x256xf32, #tpu.memory_space<any>>
      %c0_i32_20 = arith.constant 0 : i32
      %28 = tpu.memref_slice %arg1[%26, %c0_i32_20] : memref<8x256xf32, #tpu.memory_space<any>> -> memref<8x256xf32, #tpu.memory_space<any>>
      %29 = tpu.memref_slice %arg2[%11] : memref<1x!tpu.dma_semaphore, #tpu.memory_space<semaphore_mem>> -> memref<1x!tpu.dma_semaphore, #tpu.memory_space<semaphore_mem>>
      %30 = tpu.memref_squeeze %29 : memref<1x!tpu.dma_semaphore, #tpu.memory_space<semaphore_mem>> -> memref<!tpu.dma_semaphore, #tpu.memory_space<semaphore_mem>>
      tpu.wait_dma2 semaphore(%30 : memref<!tpu.dma_semaphore, #tpu.memory_space<semaphore_mem>>) src(%27 : memref<8x256xf32, #tpu.memory_space<any>>) dst(%28 : memref<8x256xf32, #tpu.memory_space<any>>)
    } else {
    }
    %c8_i32 = arith.constant 8 : i32
    %15 = arith.muli %1, %c8_i32 : i32
    %16 = tpu.assume_multiple %15, 8 : i32
    %c0_i32_9 = arith.constant 0 : i32
    %17 = tpu.memref_slice %arg0[%16, %c0_i32_9] : memref<8x256xf32, #tpu.memory_space<any>> -> memref<8x256xf32, #tpu.memory_space<any>>
    %c0_i32_10 = arith.constant 0 : i32
    %18 = tpu.memref_slice %arg1[%16, %c0_i32_10] : memref<8x256xf32, #tpu.memory_space<any>> -> memref<8x256xf32, #tpu.memory_space<any>>
    %19 = tpu.memref_slice %arg2[%11] : memref<1x!tpu.dma_semaphore, #tpu.memory_space<semaphore_mem>> -> memref<1x!tpu.dma_semaphore, #tpu.memory_space<semaphore_mem>>
    %20 = tpu.memref_squeeze %19 : memref<1x!tpu.dma_semaphore, #tpu.memory_space<semaphore_mem>> -> memref<!tpu.dma_semaphore, #tpu.memory_space<semaphore_mem>>
    tpu.enqueue_dma source(%17 : memref<8x256xf32, #tpu.memory_space<any>>) target(%18 : memref<8x256xf32, #tpu.memory_space<any>>) target_semaphore(%20 : memref<!tpu.dma_semaphore, #tpu.memory_space<semaphore_mem>>)
    %c1_i32_11 = arith.constant 1 : i32
    %c0_i32_12 = arith.constant 0 : i32
    %c0_i32_13 = arith.constant 0 : i32
    %c0_i32_14 = arith.constant 0 : i32
    %21 = tpu.memref_slice %arg0[%c0_i32_13, %c0_i32_14] : memref<8x256xf32, #tpu.memory_space<any>> -> memref<8x256xf32, #tpu.memory_space<any>>
    %c0_i32_15 = arith.constant 0 : i32
    %c0_i32_16 = arith.constant 0 : i32
    %22 = tpu.memref_slice %arg1[%c0_i32_15, %c0_i32_16] : memref<8x256xf32, #tpu.memory_space<any>> -> memref<8x256xf32, #tpu.memory_space<any>>
    %23 = tpu.memref_slice %arg2[%c0_i32_12] : memref<1x!tpu.dma_semaphore, #tpu.memory_space<semaphore_mem>> -> memref<1x!tpu.dma_semaphore, #tpu.memory_space<semaphore_mem>>
    %24 = tpu.memref_squeeze %23 : memref<1x!tpu.dma_semaphore, #tpu.memory_space<semaphore_mem>> -> memref<!tpu.dma_semaphore, #tpu.memory_space<semaphore_mem>>
    tpu.wait_dma2 semaphore(%24 : memref<!tpu.dma_semaphore, #tpu.memory_space<semaphore_mem>>) src(%21 : memref<8x256xf32, #tpu.memory_space<any>>) dst(%22 : memref<8x256xf32, #tpu.memory_space<any>>)
    return
  }
}

</mosaic_0001>

<llo_original>
// kernel: tpu_custom_call.1
$region0: #{tpu_custom_call.1}
  #allocation0 [shape = 'u32[]', space=smem, size = 0x4, offset = 0x4, fixed_abs, tag = 'smem constant byte address 0x4 - core index']
  #allocation1 [shape = 'u32[144,128]{1,0:T(1,128)}', space=vmem, size = 0x12000, scoped, tag = 'internal scratch']
  #allocation2 [shape = 's32[1]{0}', space=sflag, size = 0x4, scoped, tag = 'scratch operand']
  #allocation3 [shape = 's32[]', space=sflag, size = 0x4, offset = 0, fixed_abs, tag = 'sflag constant byte address 0x0 - dummy sync flag']
  #allocation4 [shape = 'u32[0]{0}', space=smem, size = 0, offset = 0, fixed_abs, tag = 'smem constant byte address 0x0 - null']
  %s0 = inlined_call_operand.hbm [shape: f32[8,256], index: 0, kind: input, shape index: {}]
  %s1 = inlined_call_operand.hbm [shape: f32[8,256], index: 1, kind: output, shape index: {}]
  %s2 = sld [smem:[#allocation0]]
  $region2: #{tpu_custom_call.1} parent=0
    _
  %s4 = ssub.s32 1, %s2
  %s5 = scalar_select 0, %s4, %s2
  %s6 = smul.u32 0, 2
  %s7 = smul.addr %s6, 128
  %s8 = scalar_lea.hbm %s0, %s7
  %s9 = smul.addr %s6, 128
  %s10 = scalar_lea.hbm %s1, %s9
  %s12 = sshll.u32 1, 14
  %s13 = sxor.u32 4294967295, %s12
  %17 = dma.general %s8, 256, %s10, [#allocation2], 131072, [#allocation4], 0, 0
  %s18 = smul.u32 8, 1
  %s19 = smul.u32 %s18, 2
  %s20 = sshll.u32 %s19, 4
  %21 = dma.done [#allocation2], %s20
  %22 = vsyncmov [#allocation2]
  %s23 = vpop.sfrf %22
  %p24 = scmp.eq.s32.totalorder %s23, 0
  %p25 = pneg %p24
  %27 = shalt.err (%p25)

</llo_original>
